<compile_context>
chip_gen: v5e
topology: v5e:2x2
jax: 0.10.0
libtpu: 0.0.40
codegen_flags: <defaults>
</compile_context>

<pallas_src>
import functools

import jax
import jax.numpy as jnp
from jax.experimental import pallas as pl
from jax.experimental.pallas import tpu as pltpu


def _round_up(x, m):
    return ((x + m - 1) // m) * m


def _attn_kernel(q_ref, k_ref, v_ref, *rest, inv_scale, has_mask):
    """One (batch, q-tile, k-tile) grid step of ReLU attention."""
    if has_mask:
        m_ref, o_ref, acc_ref = rest
    else:
        o_ref, acc_ref = rest

    k_step = pl.program_id(2)

    @pl.when(k_step == 0)
    def _():
        acc_ref[...] = jnp.zeros_like(acc_ref)

    q = q_ref[...]
    if inv_scale is not None:
        # Fold the scale into Q: scales tq*D elements instead of tq*tk scores.
        q = q * inv_scale

    # scores = Q @ K_tile^T -> (tq, tk), accumulated in f32 on the MXU.
    scores = jax.lax.dot_general(
        q, k_ref[...],
        dimension_numbers=(((1,), (1,)), ((), ())),
        preferred_element_type=jnp.float32,
    )
    if has_mask:
        # Generic multiplicative mask (matches `scores * mask` in the module);
        # cast per-tile so the HBM-streamed mask stays in its narrow dtype.
        scores = scores * m_ref[...].astype(jnp.float32)

    att = jnp.maximum(scores, 0.0)  # ReLU instead of softmax (per module)
    acc_ref[...] += jnp.dot(
        att.astype(v_ref.dtype), v_ref[...], preferred_element_type=jnp.float32
    )

    @pl.when(k_step == pl.num_programs(2) - 1)
    def _():
        o_ref[...] = acc_ref[...].astype(o_ref.dtype)


def scaled_dot_product_attention(Q, K, V, scale=None, mask=None,
                                 *, tq=256, tk=512):
    """Pallas TPU implementation of ScaledDotProductAttention.forward.

    Q: (B, Lq, D), K: (B, Lk, D), V: (B, Lk, Dv), mask: any shape with
    B*Lq*Lk elements (reshaped, as with `view_as(scores)`).
    """
    B, Lq, D = Q.shape
    _, Lk, _ = K.shape
    Dv = V.shape[-1]

    # PyTorch uses `if scale:` -> scale=None or scale=0 means "no scaling".
    inv_scale = None if not scale else 1.0 / float(scale)

    has_mask = mask is not None
    if has_mask:
        mask = jnp.reshape(mask, (B, Lq, Lk))  # keep original (narrow) dtype

    # ---- choose tiles and pad sequence dims so every block shape is legal ---
    if Lq <= tq:
        tq = Lq                      # full-dim block (any Lq is legal)
        Lq_p = Lq
    else:
        assert tq % 8 == 0, "q tile must be a multiple of 8 when tiling Lq"
        Lq_p = _round_up(Lq, tq)
    if Lk <= tk:
        tk = Lk                      # single k step, full-dim block
        Lk_p = Lk
    else:
        # tk is the lane (last) dim of the mask block -> multiple of 128.
        assert tk % (128 if has_mask else 8) == 0, "bad k tile size"
        Lk_p = _round_up(Lk, tk)

    if Lq_p != Lq:
        Q = jnp.pad(Q, ((0, 0), (0, Lq_p - Lq), (0, 0)))
    if Lk_p != Lk:
        K = jnp.pad(K, ((0, 0), (0, Lk_p - Lk), (0, 0)))
        V = jnp.pad(V, ((0, 0), (0, Lk_p - Lk), (0, 0)))
    if has_mask and (Lq_p != Lq or Lk_p != Lk):
        mask = jnp.pad(mask, ((0, 0), (0, Lq_p - Lq), (0, Lk_p - Lk)))
    # Zero padding is exact: padded K rows yield relu(0)=0 scores (and zero
    # mask), padded V rows are zero, padded Q rows are sliced off below.

    grid = (B, Lq_p // tq, Lk_p // tk)

    q_spec = pl.BlockSpec((pl.Squeezed(), tq, D), lambda b, i, k: (b, i, 0))
    k_spec = pl.BlockSpec((pl.Squeezed(), tk, D), lambda b, i, k: (b, k, 0))
    v_spec = pl.BlockSpec((pl.Squeezed(), tk, Dv), lambda b, i, k: (b, k, 0))
    o_spec = pl.BlockSpec((pl.Squeezed(), tq, Dv), lambda b, i, k: (b, i, 0))

    in_specs = [q_spec, k_spec, v_spec]
    args = [Q, K, V]
    if has_mask:
        in_specs.append(
            pl.BlockSpec((pl.Squeezed(), tq, tk), lambda b, i, k: (b, i, k)))
        args.append(mask)

    kernel = functools.partial(_attn_kernel, inv_scale=inv_scale,
                               has_mask=has_mask)

    out = pl.pallas_call(
        kernel,
        out_shape=jax.ShapeDtypeStruct((B, Lq_p, Dv), Q.dtype),
        grid_spec=pltpu.PrefetchScalarGridSpec(
            num_scalar_prefetch=0,
            grid=grid,
            in_specs=in_specs,
            out_specs=o_spec,
            scratch_shapes=[pltpu.VMEM((tq, Dv), jnp.float32)],
        ),
        compiler_params=pltpu.CompilerParams(
            dimension_semantics=("parallel", "parallel", "arbitrary")),
    )(*args)

    if Lq_p != Lq:
        out = out[:, :Lq, :]
    return out
    # TODO(synk): for per-head Dv < 128, pack heads into the output lane dim
    # (lane-dense stores) once a multi-head caller fixes that layout.


def _reference(Q, K, V, scale=None, mask=None):
    scores = jnp.einsum("bqd,bkd->bqk", Q, K)
    if scale:
        scores = scores / scale
    if mask is not None:
        scores = scores * jnp.reshape(mask, scores.shape)
    att = jnp.maximum(scores, 0.0)
    return jnp.einsum("bqk,bkd->bqd", att, V)


if __name__ == "__main__":
    key = jax.random.PRNGKey(0)
    kq, kk, kv, km = jax.random.split(key, 4)

    # Small shapes consistent with the module.
    B, Lq, Lk, D, Dv = 2, 8, 8, 32, 32
    Q = jax.random.normal(kq, (B, Lq, D), dtype=jnp.float32)
    K = jax.random.normal(kk, (B, Lk, D), dtype=jnp.float32)
    V = jax.random.normal(kv, (B, Lk, Dv), dtype=jnp.float32)
    mask = (jax.random.uniform(km, (B, Lq, Lk)) > 0.3).astype(jnp.float32)
    scale = float(D) ** 0.5

    # masked + scaled path
    out = jax.block_until_ready(
        scaled_dot_product_attention(Q, K, V, scale=scale, mask=mask))
    ref = _reference(Q, K, V, scale=scale, mask=mask)
    assert jnp.allclose(out, ref, atol=1e-4, rtol=1e-4), "masked path mismatch"

    # unmasked / unscaled path
    out2 = jax.block_until_ready(scaled_dot_product_attention(Q, K, V))
    ref2 = _reference(Q, K, V)
    assert jnp.allclose(out2, ref2, atol=1e-4, rtol=1e-4), "plain path mismatch"

    # a case that exercises q/k tiling, k-step accumulation and zero padding
    B2, Lq2, Lk2, D2, Dv2 = 2, 40, 300, 64, 64
    kq2, kk2, kv2, km2 = jax.random.split(jax.random.PRNGKey(1), 4)
    Q2 = jax.random.normal(kq2, (B2, Lq2, D2), dtype=jnp.float32)
    K2 = jax.random.normal(kk2, (B2, Lk2, D2), dtype=jnp.float32)
    V2 = jax.random.normal(kv2, (B2, Lk2, Dv2), dtype=jnp.float32)
    mask2 = (jax.random.uniform(km2, (B2, Lq2, Lk2)) > 0.5).astype(jnp.float32)
    scale2 = float(D2) ** 0.5
    out3 = jax.block_until_ready(
        scaled_dot_product_attention(Q2, K2, V2, scale=scale2, mask=mask2,
                                     tq=32, tk=128))
    ref3 = _reference(Q2, K2, V2, scale=scale2, mask=mask2)
    assert jnp.allclose(out3, ref3, atol=1e-3, rtol=1e-3), "tiled path mismatch"

    print("KERNEL_OK")
</pallas_src>

<mosaic_0001>
module attributes {stable_mosaic.version = 11 : i64} {
  func.func @_attn_kernel(%arg0: i32, %arg1: i32, %arg2: i32, %arg3: memref<1x8x32xf32, #tpu.memory_space<vmem>>, %arg4: memref<1x8x32xf32, #tpu.memory_space<vmem>>, %arg5: memref<1x8x32xf32, #tpu.memory_space<vmem>>, %arg6: memref<1x8x8xf32, #tpu.memory_space<vmem>>, %arg7: memref<1x8x32xf32, #tpu.memory_space<vmem>>, %arg8: memref<8x32xf32, #tpu.memory_space<vmem>>) attributes {dimension_semantics = [#tpu.dimension_semantics<parallel>, #tpu.dimension_semantics<parallel>, #tpu.dimension_semantics<arbitrary>], iteration_bounds = array<i64: 2, 1, 1>, scalar_prefetch = 0 : i64, scratch_operands = 1 : i64, tpu.core_type = #tpu.core_type<tc>, window_params = [{transform_indices = @transform_0, window_bounds = array<i64: 1, 8, 32>}, {transform_indices = @transform_1, window_bounds = array<i64: 1, 8, 32>}, {transform_indices = @transform_2, window_bounds = array<i64: 1, 8, 32>}, {transform_indices = @transform_3, window_bounds = array<i64: 1, 8, 8>}, {transform_indices = @transform_4, window_bounds = array<i64: 1, 8, 32>}]} {
    %c0_i32 = arith.constant 0 : i32
    %0 = arith.cmpi eq, %arg2, %c0_i32 : i32
    %1 = arith.extui %0 : i1 to i32
    %c0_i32_0 = arith.constant 0 : i32
    %2 = arith.cmpi ne, %1, %c0_i32_0 : i32
    scf.if %2 {
      %cst_21 = arith.constant 0.000000e+00 : f32
      %24 = vector.broadcast %cst_21 : f32 to vector<8x32xf32>
      %c0_22 = arith.constant 0 : index
      %c0_23 = arith.constant 0 : index
      %25 = vector.load %arg8[%c0_22, %c0_23] : memref<8x32xf32, #tpu.memory_space<vmem>>, vector<8x32xf32>
      tpu.vector_store %arg8[%c0_22, %c0_23], %24 {strides = array<i32>} : memref<8x32xf32, #tpu.memory_space<vmem>>, vector<8x32xf32>,
    } else {
    }
    %c0 = arith.constant 0 : index
    %c0_1 = arith.constant 0 : index
    %c0_2 = arith.constant 0 : index
    %3 = vector.load %arg3[%c0, %c0_1, %c0_2] : memref<1x8x32xf32, #tpu.memory_space<vmem>>, vector<1x8x32xf32>
    %4 = vector.shape_cast %3 : vector<1x8x32xf32> to vector<8x32xf32>
    %cst = arith.constant 0.176776692 : f32
    %5 = vector.broadcast %cst : f32 to vector<8x32xf32>
    %6 = arith.mulf %4, %5 : vector<8x32xf32>
    %c0_3 = arith.constant 0 : index
    %c0_4 = arith.constant 0 : index
    %c0_5 = arith.constant 0 : index
    %7 = vector.load %arg4[%c0_3, %c0_4, %c0_5] : memref<1x8x32xf32, #tpu.memory_space<vmem>>, vector<1x8x32xf32>
    %8 = vector.shape_cast %7 : vector<1x8x32xf32> to vector<8x32xf32>
    %cst_6 = arith.constant dense<0.000000e+00> : vector<8x8xf32>
    %9 = tpu.matmul %6, %8, %cst_6 {dimension_numbers = #tpu.dot_dimension_numbers<[1], [1], [0], [0], [0, 0, 1, 0], [], []>} : vector<8x32xf32>, vector<8x32xf32>, vector<8x8xf32> -> vector<8x8xf32>
    %c0_7 = arith.constant 0 : index
    %c0_8 = arith.constant 0 : index
    %c0_9 = arith.constant 0 : index
    %10 = vector.load %arg6[%c0_7, %c0_8, %c0_9] : memref<1x8x8xf32, #tpu.memory_space<vmem>>, vector<1x8x8xf32>
    %11 = vector.shape_cast %10 : vector<1x8x8xf32> to vector<8x8xf32>
    %12 = arith.mulf %9, %11 : vector<8x8xf32>
    %cst_10 = arith.constant 0.000000e+00 : f32
    %13 = vector.broadcast %cst_10 : f32 to vector<8x8xf32>
    %14 = arith.maximumf %12, %13 : vector<8x8xf32>
    %c0_11 = arith.constant 0 : index
    %c0_12 = arith.constant 0 : index
    %15 = vector.load %arg8[%c0_11, %c0_12] : memref<8x32xf32, #tpu.memory_space<vmem>>, vector<8x32xf32>
    %c0_13 = arith.constant 0 : index
    %c0_14 = arith.constant 0 : index
    %c0_15 = arith.constant 0 : index
    %16 = vector.load %arg5[%c0_13, %c0_14, %c0_15] : memref<1x8x32xf32, #tpu.memory_space<vmem>>, vector<1x8x32xf32>
    %17 = vector.shape_cast %16 : vector<1x8x32xf32> to vector<8x32xf32>
    %cst_16 = arith.constant dense<0.000000e+00> : vector<8x32xf32>
    %18 = tpu.matmul %14, %17, %cst_16 {dimension_numbers = #tpu.dot_dimension_numbers<[1], [0], [0], [1], [0, 0, 1, 1], [], []>} : vector<8x8xf32>, vector<8x32xf32>, vector<8x32xf32> -> vector<8x32xf32>
    %19 = arith.addf %15, %18 : vector<8x32xf32>
    %c0_17 = arith.constant 0 : index
    %c0_18 = arith.constant 0 : index
    %20 = vector.load %arg8[%c0_17, %c0_18] : memref<8x32xf32, #tpu.memory_space<vmem>>, vector<8x32xf32>
    tpu.vector_store %arg8[%c0_17, %c0_18], %19 {strides = array<i32>} : memref<8x32xf32, #tpu.memory_space<vmem>>, vector<8x32xf32>,
    %c0_i32_19 = arith.constant 0 : i32
    %21 = arith.cmpi eq, %arg2, %c0_i32_19 : i32
    %22 = arith.extui %21 : i1 to i32
    %c0_i32_20 = arith.constant 0 : i32
    %23 = arith.cmpi ne, %22, %c0_i32_20 : i32
    scf.if %23 {
      %c0_21 = arith.constant 0 : index
      %c0_22 = arith.constant 0 : index
      %24 = vector.load %arg8[%c0_21, %c0_22] : memref<8x32xf32, #tpu.memory_space<vmem>>, vector<8x32xf32>
      %c0_23 = arith.constant 0 : index
      %c0_24 = arith.constant 0 : index
      %c0_25 = arith.constant 0 : index
      %25 = vector.load %arg7[%c0_23, %c0_24, %c0_25] : memref<1x8x32xf32, #tpu.memory_space<vmem>>, vector<1x8x32xf32>
      %26 = vector.shape_cast %25 : vector<1x8x32xf32> to vector<8x32xf32>
      %27 = vector.shape_cast %24 : vector<8x32xf32> to vector<1x8x32xf32>
      tpu.vector_store %arg7[%c0_23, %c0_24, %c0_25], %27 {strides = array<i32>} : memref<1x8x32xf32, #tpu.memory_space<vmem>>, vector<1x8x32xf32>,
    } else {
    }
    return
  }
  func.func @transform_0(%arg0: i32, %arg1: i32, %arg2: i32) -> (i32, i32, i32) {
    %c0_i32 = arith.constant 0 : i32
    %c0_i32_0 = arith.constant 0 : i32
    return %arg0, %arg1, %c0_i32 : i32, i32, i32
  }
  func.func @transform_1(%arg0: i32, %arg1: i32, %arg2: i32) -> (i32, i32, i32) {
    %c0_i32 = arith.constant 0 : i32
    %c0_i32_0 = arith.constant 0 : i32
    return %arg0, %arg2, %c0_i32 : i32, i32, i32
  }
  func.func @transform_2(%arg0: i32, %arg1: i32, %arg2: i32) -> (i32, i32, i32) {
    %c0_i32 = arith.constant 0 : i32
    %c0_i32_0 = arith.constant 0 : i32
    return %arg0, %arg2, %c0_i32 : i32, i32, i32
  }
  func.func @transform_3(%arg0: i32, %arg1: i32, %arg2: i32) -> (i32, i32, i32) {
    %c0_i32 = arith.constant 0 : i32
    return %arg0, %arg1, %arg2 : i32, i32, i32
  }
  func.func @transform_4(%arg0: i32, %arg1: i32, %arg2: i32) -> (i32, i32, i32) {
    %c0_i32 = arith.constant 0 : i32
    %c0_i32_0 = arith.constant 0 : i32
    return %arg0, %arg1, %c0_i32 : i32, i32, i32
  }
}

</mosaic_0001>

<llo_original>
// kernel: tpu_custom_call.1
$region0: #{tpu_custom_call.1}
  #allocation0 [shape = 'u32[]', space=smem, size = 0x4, offset = 0x4, fixed_abs, tag = 'smem constant byte address 0x4 - core index']
  #allocation1 [shape = 'u32[72,128]{1,0:T(1,128)}', space=vmem, size = 0x9000, scoped, tag = 'internal scratch']
  #allocation2 [shape = 'f32[8,32]{1,0:T(8,128)}', space=vmem, size = 0x1000, scoped, tag = 'scratch operand']
  %s0 = inlined_call_operand.hbm [shape: f32[2,8,32], index: 0, kind: input, shape index: {}]
  %s1 = inlined_call_operand.hbm [shape: f32[2,8,32], index: 1, kind: input, shape index: {}]
  %s2 = inlined_call_operand.hbm [shape: f32[2,8,32], index: 2, kind: input, shape index: {}]
  %s3 = inlined_call_operand.hbm [shape: f32[2,8,8], index: 3, kind: input, shape index: {}]
  %s4 = inlined_call_operand.hbm [shape: f32[2,8,32], index: 4, kind: output, shape index: {}]
  %s5 = sld [smem:[#allocation0]]
  $region73: #{tpu_custom_call.1} parent=0
    _
  %s7 = ssub.s32 1, %s5
  %s8 = scalar_select 0, %s7, %s5
  $region1: #{tpu_custom_call.1} parent=0
    #allocation3 [shape = 'u8[8192]{0}', space=vmem, size = 0x2000, scoped, tag = 'input window, operand 0']
    #allocation4 [shape = 's32[2]{0}', space=sflag, size = 0x8, scoped, tag = 'scoped memory for tpu_custom_call.1']
    #allocation5 [shape = 's32[2]{0}', space=sflag, size = 0x8, scoped, tag = 'scoped memory for tpu_custom_call.1']
    #allocation6 [shape = 'u8[8192]{0}', space=vmem, size = 0x2000, scoped, tag = 'input window, operand 1']
    #allocation7 [shape = 's32[2]{0}', space=sflag, size = 0x8, scoped, tag = 'scoped memory for tpu_custom_call.1']
    #allocation8 [shape = 'u8[8192]{0}', space=vmem, size = 0x2000, scoped, tag = 'input window, operand 2']
    #allocation9 [shape = 'u8[8192]{0}', space=vmem, size = 0x2000, scoped, tag = 'input window, operand 3']
    #allocation10 [shape = 's32[2]{0}', space=sflag, size = 0x8, scoped, tag = 'scoped memory for tpu_custom_call.1']
    #allocation11 [shape = 'u8[8192]{0}', space=vmem, size = 0x2000, scoped, tag = 'output window, operand 0']
    %9 = vsyncpa [#allocation4], 0
    %s10 = scalar_lea.sflag [#allocation4], 1
    %11 = vsyncpa %s10, 0
    %12 = vsyncpa [#allocation7], 0
    %s13 = scalar_lea.sflag [#allocation7], 1
    %14 = vsyncpa %s13, 0
    %15 = vsyncpa [#allocation10], 0
    %s16 = scalar_lea.sflag [#allocation10], 1
    %17 = vsyncpa %s16, 0
    %18 = vsyncpa [#allocation5], 0
    %s19 = scalar_lea.sflag [#allocation5], 1
    %20 = vsyncpa %s19, 0
    loop: start=0, step=1, limit=4
    $region2: #{tpu_custom_call.1} parent=1 // loop_pre_header
      _
    $region3: #{tpu_custom_call.1} parent=1 // loop_header
      %s22 = sphi 0, %s26
      %p23 = scmp.ge.s32.totalorder %s22, 4
      %s29 = sphi 0, %s48
      %s30 = sphi 0, %s44
      %s31 = sphi 0, %s40
      %s32 = sphi 0, %s29
      %s33 = sphi 0, %s30
      %s34 = sphi 0, %s31
      %s35 = sphi 0, %s32
      %s36 = sphi 0, %s33
      %s37 = sphi 0, %s34
      %s53 = sphi 0, %s55
      %s56 = sphi 0, %s53
      %s57 = sphi 0, %s56
      %s73 = sphi 0, %s57
      %s81 = sphi 0, %s83
      %s84 = sphi 0, %s81
      %s85 = sphi 0, %s84
      %s101 = sphi 0, %s85
      %s109 = sphi 0, %s111
      %s112 = sphi 0, %s109
      %s113 = sphi 0, %s112
      %s129 = sphi 0, %s113
      %s139 = sphi 0, %s141
      %s142 = sphi 0, %s139
      %s143 = sphi 0, %s142
      %s159 = sphi 0, %s143
      %s167 = sphi 0, %s169
      %s170 = sphi 0, %s167
      %s171 = sphi 0, %s170
      %s187 = sphi 0, %s171
    $region4: #{tpu_custom_call.1} parent=1 // loop_header_branch
      %25 = sbr.rel (%p23) target = $region8
    $region5: #{tpu_custom_call.1} parent=1 // loop_body
      %s27 = ssub.s32 %s22, 1
      %s28 = ssub.s32 %s22, 2
      %s38 = sadd.s32 1, %s31
      %p39 = scmp.ge.s32.totalorder %s38, 1
      %s40 = scalar_select %p39, 0, %s38
      %s41 = sadd.s32 1, %s30
      %s42 = scalar_select %p39, %s41, %s30
      %p43 = scmp.ge.s32.totalorder %s42, 1
      %s44 = scalar_select %p43, 0, %s42
      %s45 = sadd.s32 1, %s29
      %s46 = scalar_select %p43, %s45, %s29
      %p47 = scmp.ge.s32.totalorder %s46, 2
      %s48 = scalar_select %p47, 0, %s46
      %s49 = ssub.s32 %s29, %s48
      %s50 = ssub.s32 %s30, %s44
      %s51 = sor.u32 %s49, %s50
      %p52 = scmp.eq.s32.totalorder %s51, 0
      %s54 = sadd.s32 %s53, 1
      %s55 = scalar_select %p52, %s53, %s54
      %p58 = pneg %p52
      %p59 = scmp.eq.s32.totalorder %s22, 1
      %p60 = por %p58, %p59
      %p61 = scmp.ne.s32.totalorder %s53, %s56
      %p62 = scmp.eq.s32.totalorder %s22, 0
      %p63 = por %p61, %p62
      %p64 = scmp.ne.s32.totalorder %s53, %s56
      %p65 = scmp.eq.s32.totalorder %s27, 1
      %p66 = por %p64, %p65
      %p67 = scmp.ne.s32.totalorder %s56, %s57
      %p68 = scmp.eq.s32.totalorder %s27, 0
      %p69 = por %p67, %p68
      %p70 = scmp.ne.s32.totalorder %s56, %s57
      %p71 = scmp.eq.s32.totalorder %s28, 1
      %p72 = por %p70, %p71
      %p74 = scmp.ne.s32.totalorder %s57, %s73
      %p75 = scmp.eq.s32.totalorder %s28, 0
      %p76 = por %p74, %p75
      %s77 = ssub.s32 %s29, %s48
      %s78 = ssub.s32 %s31, %s40
      %s79 = sor.u32 %s77, %s78
      %p80 = scmp.eq.s32.totalorder %s79, 0
      %s82 = sadd.s32 %s81, 1
      %s83 = scalar_select %p80, %s81, %s82
      %p86 = pneg %p80
      %p87 = scmp.eq.s32.totalorder %s22, 1
      %p88 = por %p86, %p87
      %p89 = scmp.ne.s32.totalorder %s81, %s84
      %p90 = scmp.eq.s32.totalorder %s22, 0
      %p91 = por %p89, %p90
      %p92 = scmp.ne.s32.totalorder %s81, %s84
      %p93 = scmp.eq.s32.totalorder %s27, 1
      %p94 = por %p92, %p93
      %p95 = scmp.ne.s32.totalorder %s84, %s85
      %p96 = scmp.eq.s32.totalorder %s27, 0
      %p97 = por %p95, %p96
      %p98 = scmp.ne.s32.totalorder %s84, %s85
      %p99 = scmp.eq.s32.totalorder %s28, 1
      %p100 = por %p98, %p99
      %p102 = scmp.ne.s32.totalorder %s85, %s101
      %p103 = scmp.eq.s32.totalorder %s28, 0
      %p104 = por %p102, %p103
      %s105 = ssub.s32 %s29, %s48
      %s106 = ssub.s32 %s31, %s40
      %s107 = sor.u32 %s105, %s106
      %p108 = scmp.eq.s32.totalorder %s107, 0
      %s110 = sadd.s32 %s109, 1
      %s111 = scalar_select %p108, %s109, %s110
      %p114 = pneg %p108
      %p115 = scmp.eq.s32.totalorder %s22, 1
      %p116 = por %p114, %p115
      %p117 = scmp.ne.s32.totalorder %s109, %s112
      %p118 = scmp.eq.s32.totalorder %s22, 0
      %p119 = por %p117, %p118
      %p120 = scmp.ne.s32.totalorder %s109, %s112
      %p121 = scmp.eq.s32.totalorder %s27, 1
      %p122 = por %p120, %p121
      %p123 = scmp.ne.s32.totalorder %s112, %s113
      %p124 = scmp.eq.s32.totalorder %s27, 0
      %p125 = por %p123, %p124
      %p126 = scmp.ne.s32.totalorder %s112, %s113
      %p127 = scmp.eq.s32.totalorder %s28, 1
      %p128 = por %p126, %p127
      %p130 = scmp.ne.s32.totalorder %s113, %s129
      %p131 = scmp.eq.s32.totalorder %s28, 0
      %p132 = por %p130, %p131
      %s133 = ssub.s32 %s29, %s48
      %s134 = ssub.s32 %s30, %s44
      %s135 = sor.u32 %s133, %s134
      %s136 = ssub.s32 %s31, %s40
      %s137 = sor.u32 %s135, %s136
      %p138 = scmp.eq.s32.totalorder %s137, 0
      %s140 = sadd.s32 %s139, 1
      %s141 = scalar_select %p138, %s139, %s140
      %p144 = pneg %p138
      %p145 = scmp.eq.s32.totalorder %s22, 1
      %p146 = por %p144, %p145
      %p147 = scmp.ne.s32.totalorder %s139, %s142
      %p148 = scmp.eq.s32.totalorder %s22, 0
      %p149 = por %p147, %p148
      %p150 = scmp.ne.s32.totalorder %s139, %s142
      %p151 = scmp.eq.s32.totalorder %s27, 1
      %p152 = por %p150, %p151
      %p153 = scmp.ne.s32.totalorder %s142, %s143
      %p154 = scmp.eq.s32.totalorder %s27, 0
      %p155 = por %p153, %p154
      %p156 = scmp.ne.s32.totalorder %s142, %s143
      %p157 = scmp.eq.s32.totalorder %s28, 1
      %p158 = por %p156, %p157
      %p160 = scmp.ne.s32.totalorder %s143, %s159
      %p161 = scmp.eq.s32.totalorder %s28, 0
      %p162 = por %p160, %p161
      %s163 = ssub.s32 %s29, %s48
      %s164 = ssub.s32 %s30, %s44
      %s165 = sor.u32 %s163, %s164
      %p166 = scmp.eq.s32.totalorder %s165, 0
      %s168 = sadd.s32 %s167, 1
      %s169 = scalar_select %p166, %s167, %s168
      %p172 = pneg %p166
      %p173 = scmp.eq.s32.totalorder %s22, 1
      %p174 = por %p172, %p173
      %p175 = scmp.ne.s32.totalorder %s167, %s170
      %p176 = scmp.eq.s32.totalorder %s22, 0
      %p177 = por %p175, %p176
      %p178 = scmp.ne.s32.totalorder %s167, %s170
      %p179 = scmp.eq.s32.totalorder %s27, 1
      %p180 = por %p178, %p179
      %p181 = scmp.ne.s32.totalorder %s170, %s171
      %p182 = scmp.eq.s32.totalorder %s27, 0
      %p183 = por %p181, %p182
      %p184 = scmp.ne.s32.totalorder %s170, %s171
      %p185 = scmp.eq.s32.totalorder %s28, 1
      %p186 = por %p184, %p185
      %p188 = scmp.ne.s32.totalorder %s171, %s187
      %p189 = scmp.eq.s32.totalorder %s28, 0
      %p190 = por %p188, %p189
      %p191 = scmp.le.s32.totalorder 1, %s22
      %p192 = scmp.lt.s32.totalorder %s22, 3
      %p193 = pnand %p191, %p192
      %p194 = pneg %p193
      // Predicated region
      $region9: #{tpu_custom_call.1} parent=5 // pred_check
        _
      $region10: #{tpu_custom_call.1} parent=5 // pred_check_branch
        %196 = sbr.rel (%p193) target = $region12
      $region11: #{tpu_custom_call.1} parent=5 // pred_region
        %s197 = ssub.s32 %s22, 1
      $region12: #{tpu_custom_call.1} parent=5 // pred_fallthru
        _
      %p198 = scmp.lt.s32.totalorder %s22, 2
      // Predicated region
      $region13: #{tpu_custom_call.1} parent=5 // pred_check
        %p199 = pneg %p198
      $region14: #{tpu_custom_call.1} parent=5 // pred_check_branch
        %201 = sbr.rel (%p199) target = $region16
      $region15: #{tpu_custom_call.1} parent=5 // pred_region
        // Predicated region
        $region17: #{tpu_custom_call.1} parent=15 // pred_check
          %p202 = pneg %p63
        $region18: #{tpu_custom_call.1} parent=15 // pred_check_branch
          %204 = sbr.rel (%p202) target = $region20
        $region19: #{tpu_custom_call.1} parent=15 // pred_region
          %s205 = sand.u32 %s53, 1
          %s206 = scalar_lea.sflag [#allocation4], %s205
          %s207 = sand.u32 %s53, 1
          %s208 = smul.addr %s207, 8
          %s209 = scalar_lea.vmem [#allocation3], %s208
          %211 = vsyncadd %s206, 0
          %s212 = sadd.s32 %s30, %s29
          %s213 = smul.addr %s212, 8
          %s214 = scalar_lea.hbm %s0, %s213
          %s216 = sshll.u32 %s214, 4
          %s217 = int_to_ptr.hbm [resolvable:$true] %s216
          %s218 = sshll.u32 %s209, 4
          %s219 = int_to_ptr.vmem [resolvable:$true] %s218
          %221 = dma.hbm_to_vmem [thread:$0]  %s217, 128, %s219, %s206
        $region20: #{tpu_custom_call.1} parent=15 // pred_fallthru
          _
        // Predicated region
        $region21: #{tpu_custom_call.1} parent=15 // pred_check
          %p222 = pneg %p91
        $region22: #{tpu_custom_call.1} parent=15 // pred_check_branch
          %224 = sbr.rel (%p222) target = $region24
        $region23: #{tpu_custom_call.1} parent=15 // pred_region
          %s225 = sand.u32 %s22, 1
          %s226 = scalar_lea.sflag [#allocation7], %s225
          %s227 = sand.u32 %s81, 1
          %s228 = smul.addr %s227, 8
          %s229 = scalar_lea.vmem [#allocation6], %s228
          %231 = vsyncadd %s226, 0
          %s232 = sadd.s32 %s31, %s29
          %s233 = smul.addr %s232, 8
          %s234 = scalar_lea.hbm %s1, %s233
          %s236 = sshll.u32 %s234, 4
          %s237 = int_to_ptr.hbm [resolvable:$true] %s236
          %s238 = sshll.u32 %s229, 4
          %s239 = int_to_ptr.vmem [resolvable:$true] %s238
          %241 = dma.hbm_to_vmem [thread:$0]  %s237, 128, %s239, %s226
        $region24: #{tpu_custom_call.1} parent=15 // pred_fallthru
          _
        // Predicated region
        $region25: #{tpu_custom_call.1} parent=15 // pred_check
          %p242 = pneg %p119
        $region26: #{tpu_custom_call.1} parent=15 // pred_check_branch
          %244 = sbr.rel (%p242) target = $region28
        $region27: #{tpu_custom_call.1} parent=15 // pred_region
          %s245 = sand.u32 %s22, 1
          %s246 = scalar_lea.sflag [#allocation7], %s245
          %s247 = sand.u32 %s109, 1
          %s248 = smul.addr %s247, 8
          %s249 = scalar_lea.vmem [#allocation8], %s248
          %251 = vsyncadd %s246, 0
          %s252 = sadd.s32 %s31, %s29
          %s253 = smul.addr %s252, 8
          %s254 = scalar_lea.hbm %s2, %s253
          %s256 = sshll.u32 %s254, 4
          %s257 = int_to_ptr.hbm [resolvable:$true] %s256
          %s258 = sshll.u32 %s249, 4
          %s259 = int_to_ptr.vmem [resolvable:$true] %s258
          %261 = dma.hbm_to_vmem [thread:$0]  %s257, 128, %s259, %s246
        $region28: #{tpu_custom_call.1} parent=15 // pred_fallthru
          _
        // Predicated region
        $region29: #{tpu_custom_call.1} parent=15 // pred_check
          %p262 = pneg %p149
        $region30: #{tpu_custom_call.1} parent=15 // pred_check_branch
          %264 = sbr.rel (%p262) target = $region32
        $region31: #{tpu_custom_call.1} parent=15 // pred_region
          %s265 = sand.u32 %s139, 1
          %s266 = scalar_lea.sflag [#allocation10], %s265
          %s267 = sand.u32 %s139, 1
          %s268 = smul.addr %s267, 8
          %s269 = scalar_lea.vmem [#allocation9], %s268
          %271 = vsyncadd %s266, 0
          %s272 = sadd.s32 %s31, %s30
          %s273 = sadd.s32 %s272, %s29
          %s274 = smul.addr %s273, 8
          %s275 = scalar_lea.hbm %s3, %s274
          %s277 = sshll.u32 %s275, 4
          %s278 = int_to_ptr.hbm [resolvable:$true] %s277
          %s279 = sshll.u32 %s269, 4
          %s280 = int_to_ptr.vmem [resolvable:$true] %s279
          %282 = dma.hbm_to_vmem [thread:$0]  %s278, 128, %s280, %s266
        $region32: #{tpu_custom_call.1} parent=15 // pred_fallthru
          _
      $region16: #{tpu_custom_call.1} parent=5 // pred_fallthru
        _
      %p283 = scmp.le.s32.totalorder 1, %s22
      %p284 = scmp.lt.s32.totalorder %s22, 3
      %p285 = pnand %p283, %p284
      %p286 = pneg %p285
      // Predicated region
      $region33: #{tpu_custom_call.1} parent=5 // pred_check
        _
      $region34: #{tpu_custom_call.1} parent=5 // pred_check_branch
        %288 = sbr.rel (%p285) target = $region36
      $region35: #{tpu_custom_call.1} parent=5 // pred_region
        %s289 = ssub.s32 %s22, 1
        %s290 = sand.u32 %s56, 1
        %s291 = scalar_lea.sflag [#allocation4], %s290
        %s292 = sand.u32 %s56, 1
        %s293 = smul.addr %s292, 8
        %s294 = scalar_lea.vmem [#allocation3], %s293
        // Predicated region
        $region37: #{tpu_custom_call.1} parent=35 // pred_check
          %p295 = pneg %p69
        $region38: #{tpu_custom_call.1} parent=35 // pred_check_branch
          %297 = sbr.rel (%p295) target = $region40
        $region39: #{tpu_custom_call.1} parent=35 // pred_region
          %299 = dma.done %s291, 128
        $region40: #{tpu_custom_call.1} parent=35 // pred_fallthru
          _
        %s300 = sand.u32 %s27, 1
        %s301 = scalar_lea.sflag [#allocation7], %s300
        %s302 = sand.u32 %s84, 1
        %s303 = smul.addr %s302, 8
        %s304 = scalar_lea.vmem [#allocation6], %s303
        // Predicated region
        $region41: #{tpu_custom_call.1} parent=35 // pred_check
          %p305 = pneg %p97
        $region42: #{tpu_custom_call.1} parent=35 // pred_check_branch
          %307 = sbr.rel (%p305) target = $region44
        $region43: #{tpu_custom_call.1} parent=35 // pred_region
          %309 = dma.done %s301, 128
        $region44: #{tpu_custom_call.1} parent=35 // pred_fallthru
          _
        %s310 = sand.u32 %s27, 1
        %s311 = scalar_lea.sflag [#allocation7], %s310
        %s312 = sand.u32 %s112, 1
        %s313 = smul.addr %s312, 8
        %s314 = scalar_lea.vmem [#allocation8], %s313
        // Predicated region
        $region45: #{tpu_custom_call.1} parent=35 // pred_check
          %p315 = pneg %p125
        $region46: #{tpu_custom_call.1} parent=35 // pred_check_branch
          %317 = sbr.rel (%p315) target = $region48
        $region47: #{tpu_custom_call.1} parent=35 // pred_region
          %319 = dma.done %s311, 128
        $region48: #{tpu_custom_call.1} parent=35 // pred_fallthru
          _
        %s320 = sand.u32 %s142, 1
        %s321 = scalar_lea.sflag [#allocation10], %s320
        %s322 = sand.u32 %s142, 1
        %s323 = smul.addr %s322, 8
        %s324 = scalar_lea.vmem [#allocation9], %s323
        // Predicated region
        $region49: #{tpu_custom_call.1} parent=35 // pred_check
          %p325 = pneg %p155
        $region50: #{tpu_custom_call.1} parent=35 // pred_check_branch
          %327 = sbr.rel (%p325) target = $region52
        $region51: #{tpu_custom_call.1} parent=35 // pred_region
          %329 = dma.done %s321, 128
        $region52: #{tpu_custom_call.1} parent=35 // pred_fallthru
          _
        %s330 = sand.u32 %s56, 1
        %s331 = scalar_lea.sflag [#allocation4], %s330
        %s332 = sand.u32 %s56, 1
        %s333 = smul.addr %s332, 8
        %s334 = scalar_lea.vmem [#allocation3], %s333
        %p335 = pneg %p69
        %p336 = pneg %p66
        %s337 = sand.u32 %s27, 1
        %s338 = scalar_lea.sflag [#allocation7], %s337
        %s339 = sand.u32 %s84, 1
        %s340 = smul.addr %s339, 8
        %s341 = scalar_lea.vmem [#allocation6], %s340
        %p342 = pneg %p97
        %p343 = pneg %p94
        %s344 = sand.u32 %s27, 1
        %s345 = scalar_lea.sflag [#allocation7], %s344
        %s346 = sand.u32 %s112, 1
        %s347 = smul.addr %s346, 8
        %s348 = scalar_lea.vmem [#allocation8], %s347
        %p349 = pneg %p125
        %p350 = pneg %p122
        %s351 = sand.u32 %s142, 1
        %s352 = scalar_lea.sflag [#allocation10], %s351
        %s353 = sand.u32 %s142, 1
        %s354 = smul.addr %s353, 8
        %s355 = scalar_lea.vmem [#allocation9], %s354
        %p356 = pneg %p155
        %p357 = pneg %p152
        %p358 = pneg %p183
        %p359 = pneg %p180
        %s360 = sand.u32 %s170, 1
        %s361 = scalar_lea.sflag [#allocation5], %s360
        %s362 = sand.u32 %s170, 1
        %s363 = smul.addr %s362, 8
        %s364 = scalar_lea.vmem [#allocation11], %s363
        %p365 = scmp.eq.s32.totalorder %s34, 0
        // Predicated region
        $region53: #{tpu_custom_call.1} parent=35 // pred_check
          %p366 = pneg %p365
        $region54: #{tpu_custom_call.1} parent=35 // pred_check_branch
          %368 = sbr.rel (%p366) target = $region56
        $region55: #{tpu_custom_call.1} parent=35 // pred_region
          %vm369 = vcmask 261120
          %370 = vst.msk [vmem:[#allocation2] sm:$0xff] %vm369, 0.0
        $region56: #{tpu_custom_call.1} parent=35 // pred_fallthru
          _
        %v371 = vld [vmem:[%s294] sm:$0xff]
        %v372 = vmul.f32 %v371, 0.17677669
        %v373 = vld [vmem:[%s304] sm:$0xff]
        %vm374 = vcmask 261120
        %v376 = vsel %vm374, %v372, 0
        %v379 = vsel %vm374, %v373, 0
        %381 = vmatpush.xpose.msra.mxu0 0.0
        %382 = vmatpush.xpose.msra.mxu0 0.0
        %383 = vmatpush.xpose.msra.mxu0 0.0
        %384 = vmatpush.xpose.msra.mxu0 0.0
        %385 = vmatpush.xpose.msra.mxu0 0.0
        %386 = vmatpush.xpose.msra.mxu0 0.0
        %387 = vmatpush.xpose.msra.mxu0 0.0
        %388 = vmatpush.xpose.msra.mxu0 0.0
        %389 = vmatpush.xpose.msra.mxu0 0.0
        %390 = vmatpush.xpose.msra.mxu0 0.0
        %391 = vmatpush.xpose.msra.mxu0 0.0
        %392 = vmatpush.xpose.msra.mxu0 0.0
        %393 = vmatpush.xpose.msra.mxu0 0.0
        %394 = vmatpush.xpose.msra.mxu0 0.0
        %395 = vmatpush.xpose.msra.mxu0 0.0
        %396 = vmatpush.xpose.msra.mxu0 %v379
        %397 = vmatmul.f32.gmra.mxu0 %v376
        %v398 = vpop.f32.mrf.mxu0
        %v399 = vadd.f32 0.0, %v398
        %400 = vdwg.mxu0
        %v401 = vld [vmem:[%s324] sm:$0xff]
        %v402 = vmul.f32 %v399, %v401
        %v403 = vmax.f32 %v402, 0.0
        %v404 = vld [vmem:[#allocation2] sm:$0xff]
        %v405 = vld [vmem:[%s314] sm:$0xff]
        %vm406 = vcmask 64512
        %v408 = vsel %vm406, %v403, 0
        %410 = vmatpush.msra.mxu0 0.0
        %411 = vmatpush.msra.mxu0 0.0
        %412 = vmatpush.msra.mxu0 0.0
        %413 = vmatpush.msra.mxu0 0.0
        %414 = vmatpush.msra.mxu0 0.0
        %415 = vmatpush.msra.mxu0 0.0
        %416 = vmatpush.msra.mxu0 0.0
        %417 = vmatpush.msra.mxu0 0.0
        %418 = vmatpush.msra.mxu0 0.0
        %419 = vmatpush.msra.mxu0 0.0
        %420 = vmatpush.msra.mxu0 0.0
        %421 = vmatpush.msra.mxu0 0.0
        %422 = vmatpush.msra.mxu0 0.0
        %423 = vmatpush.msra.mxu0 0.0
        %424 = vmatpush.msra.mxu0 0.0
        %425 = vmatpush.msra.mxu0 %v405
        %426 = vmatmul.f32.gmra.mxu0 %v408
        %v427 = vpop.f32.mrf.mxu0
        %v428 = vadd.f32 0.0, %v427
        %429 = vdwg.mxu0
        %v430 = vadd.f32 %v404, %v428
        %431 = vst.msk [vmem:[#allocation2] sm:$0xff] %vm374, %v430
        // Predicated region
        $region57: #{tpu_custom_call.1} parent=35 // pred_check
          %p432 = pneg %p365
        $region58: #{tpu_custom_call.1} parent=35 // pred_check_branch
          %434 = sbr.rel (%p432) target = $region60
        $region59: #{tpu_custom_call.1} parent=35 // pred_region
          %v435 = vld [vmem:[#allocation2] sm:$0xff]
          %436 = vst.msk [vmem:[%s364] sm:$0xff] %vm374, %v435
        $region60: #{tpu_custom_call.1} parent=35 // pred_fallthru
          _
        %s437 = sand.u32 %s170, 1
        %s438 = scalar_lea.sflag [#allocation5], %s437
        %s439 = sand.u32 %s170, 1
        %s440 = smul.addr %s439, 8
        %s441 = scalar_lea.vmem [#allocation11], %s440
        // Predicated region
        $region61: #{tpu_custom_call.1} parent=35 // pred_check
          %p442 = pneg %p180
        $region62: #{tpu_custom_call.1} parent=35 // pred_check_branch
          %444 = sbr.rel (%p442) target = $region64
        $region63: #{tpu_custom_call.1} parent=35 // pred_region
          %446 = vsyncadd %s438, 0
          %s447 = sadd.s32 %s33, %s32
          %s448 = smul.addr %s447, 8
          %s449 = scalar_lea.hbm %s4, %s448
          %s451 = sshll.u32 %s441, 4
          %s452 = int_to_ptr.vmem [resolvable:$true] %s451
          %s453 = sshll.u32 %s449, 4
          %s454 = int_to_ptr.hbm [resolvable:$true] %s453
          %456 = dma.vmem_to_hbm [thread:$0]  %s452, 128, %s454, %s438
        $region64: #{tpu_custom_call.1} parent=35 // pred_fallthru
          _
      $region36: #{tpu_custom_call.1} parent=5 // pred_fallthru
        _
      %p457 = scmp.le.s32.totalorder 2, %s22
      // Predicated region
      $region65: #{tpu_custom_call.1} parent=5 // pred_check
        %p458 = pneg %p457
      $region66: #{tpu_custom_call.1} parent=5 // pred_check_branch
        %460 = sbr.rel (%p458) target = $region68
      $region67: #{tpu_custom_call.1} parent=5 // pred_region
        %s461 = ssub.s32 %s22, 2
        // Predicated region
        $region69: #{tpu_custom_call.1} parent=67 // pred_check
          %p462 = pneg %p186
        $region70: #{tpu_custom_call.1} parent=67 // pred_check_branch
          %464 = sbr.rel (%p462) target = $region72
        $region71: #{tpu_custom_call.1} parent=67 // pred_region
          %s465 = sand.u32 %s171, 1
          %s466 = scalar_lea.sflag [#allocation5], %s465
          %s467 = sand.u32 %s171, 1
          %s468 = smul.addr %s467, 8
          %s469 = scalar_lea.vmem [#allocation11], %s468
          %471 = dma.done %s466, 128
        $region72: #{tpu_custom_call.1} parent=67 // pred_fallthru
          _
      $region68: #{tpu_custom_call.1} parent=5 // pred_fallthru
        _
    $region6: #{tpu_custom_call.1} parent=1 // loop_footer
      %s26 = sadd.s32 1, %s22
    $region7: #{tpu_custom_call.1} parent=1 // loop_footer_branch
      %21 = sbr.rel target = $region3
    $region8: #{tpu_custom_call.1} parent=1 // loop_exit
      _
    %472 = vsyncpa [#allocation4], 1
    %s473 = scalar_lea.sflag [#allocation4], 1
    %474 = vsyncpa %s473, 1
    %475 = vsyncpa [#allocation7], 1
    %s476 = scalar_lea.sflag [#allocation7], 1
    %477 = vsyncpa %s476, 1
    %478 = vsyncpa [#allocation10], 1
    %s479 = scalar_lea.sflag [#allocation10], 1
    %480 = vsyncpa %s479, 1
    %481 = vsyncpa [#allocation5], 1
    %s482 = scalar_lea.sflag [#allocation5], 1
    %483 = vsyncpa %s482, 1

</llo_original>
